<compile_context>
chip_gen: v7x
topology: tpu7x:2x2x1
jax: 0.10.0
libtpu: 0.0.40
codegen_flags: <defaults>
</compile_context>

<pallas_src>
import functools
import math

import jax
import jax.numpy as jnp
from jax.experimental import pallas as pl
from jax.experimental.pallas import tpu as pltpu

_LANE = 128


def _round_up(a, b):
    return ((a + b - 1) // b) * b


def _cdiv(a, b):
    return (a + b - 1) // b


def _pow(d, gamma):
    """d ** gamma with cheap special cases for small integer gamma (d >= 0)."""
    g = float(gamma)
    if g == 1.0:
        return d
    if g == 2.0:
        return d * d
    if g == 3.0:
        return d * d * d
    if g == float(int(g)) and 1.0 <= g <= 8.0:
        r = d
        for _ in range(int(g) - 1):
            r = r * d
        return r
    # General float gamma lowers to exp(g*log(d)); floor keeps log finite at d==0.
    return jnp.maximum(d, jnp.float32(1e-30)) ** jnp.float32(g)


def _focal_loss_kernel(*refs, alpha, gamma, label_smooth, epsilon, n_rows,
                       tile_rows, has_weight):
    """One grid step: (tile_rows, C) logits -> one partial-sum output block.

    refs = (x_ref, y_ref, [w_ref,] out_ref).  Blocks are independent across
    grid steps -> the row axis is a 'parallel' grid dimension.
    """
    if has_weight:
        x_ref, y_ref, w_ref, out_ref = refs
    else:
        x_ref, y_ref, out_ref = refs
        w_ref = None

    i = pl.program_id(0)

    x = x_ref[...].astype(jnp.float32)            # (T, C)
    labels = y_ref[...]                           # (T, 1) int32
    tn, num_classes = x.shape

    # Softmax pieces: one exp over the tile, per-row log of the denominator.
    m = jnp.max(x, axis=-1, keepdims=True)
    xm = x - m
    e = jnp.exp(xm)
    s = jnp.sum(e, axis=-1, keepdims=True)        # (T, 1)
    log_s = jnp.log(s)

    col = jax.lax.broadcasted_iota(jnp.int32, (tn, num_classes), 1)
    is_tgt = col == labels                        # (T, C) bool

    log_eps = jnp.float32(math.log(epsilon))
    log_1me = jnp.float32(math.log1p(-epsilon))

    if label_smooth == 0.0:
        # Fast path: one-hot label -> only the target class contributes.
        xm_t = jnp.sum(jnp.where(is_tgt, xm, 0.0), axis=-1, keepdims=True)
        logp_t = jnp.clip(xm_t - log_s, log_eps, log_1me)   # clip(log p) == log(clip p)
        p_t = jnp.exp(logp_t)                     # per-row EUP exp; already in [eps, 1-eps]
        focal = _pow(1.0 - p_t, gamma)            # |1 - p| == 1 - p here
        row_loss = (-logp_t) * focal              # (T, 1)
        if has_weight:
            row_loss = row_loss * w_ref[...]      # (T, 1) gathered per-row class weight
        row_loss = row_loss * jnp.float32(alpha)
    else:
        # General path (label smoothing): full (T, C) math, scalars folded post-sum.
        inv_s = pl.reciprocal(s)                  # exact (no approx)
        p = jnp.clip(e * inv_s, jnp.float32(epsilon), jnp.float32(1.0 - epsilon))
        logp = jnp.clip(xm - log_s, log_eps, log_1me)
        on_val = jnp.float32(1.0 - label_smooth + label_smooth / num_classes)
        off_val = jnp.float32(label_smooth / num_classes)
        one_hot = jnp.where(is_tgt, on_val, off_val)
        focal = _pow(jnp.abs(one_hot - p), gamma)
        loss = one_hot * logp * focal
        if has_weight:
            loss = loss * w_ref[...]              # (1, C) per-class weights, broadcast
        row_loss = jnp.float32(-alpha) * jnp.sum(loss, axis=-1, keepdims=True)

    # Mask rows past N (ragged last tile), then reduce to a per-tile scalar.
    row_idx = i * tile_rows + jax.lax.broadcasted_iota(jnp.int32, (tn, 1), 0)
    row_loss = jnp.where(row_idx < n_rows, row_loss, 0.0)

    tile_sum = jnp.sum(row_loss, axis=0, keepdims=True)     # (1, 1)
    out_ref[...] = jnp.broadcast_to(tile_sum.reshape(1, 1, 1), out_ref.shape)


def focal_loss_with_weight(x, y, *, alpha=0.25, gamma=2.0, label_smooth=0.0,
                           weight=None, epsilon=1e-7, tile_rows=None,
                           vmem_budget_bytes=24 * 1024 * 1024):
    """Pallas implementation of FocalLossWithWeight.forward
    (sample_weights=0, len(y.shape)==1 path).

    x: (N, C) logits (f32 or bf16); y: (N,) integer labels;
    weight: optional (C,) per-class weight (module's self.weight).
    """
    N, C = x.shape
    itemsize = jnp.dtype(x.dtype).itemsize
    sub = {4: 8, 2: 16, 1: 32}.get(itemsize, 8)   # sublane multiple per dtype

    has_weight = weight is not None
    fast_path = float(label_smooth) == 0.0

    # --- VMEM-budget-based row-tile sizing (lane padding of small C included) ---
    x_row_b = _round_up(C, _LANE) * itemsize              # logits, per row in VMEM
    y_row_b = _LANE * 4                                   # labels (T,1) int32, lane-padded
    w_row_b = _LANE * 4 if (has_weight and fast_path) else 0
    per_row_b = x_row_b + y_row_b + w_row_b
    fixed_b = 2 * (8 * _LANE * 4)                         # output blocks
    if has_weight and not fast_path:
        fixed_b += 2 * _round_up(C, _LANE) * 4            # resident (1, C) weights
    budget_rows = ((int(vmem_budget_bytes) - fixed_b) // (2 * per_row_b)) // sub * sub
    budget_rows = max(sub, budget_rows)

    if tile_rows is None:
        # Keep grid_n >= 2 when N allows, so v7x megacore can split the rows.
        pref = _round_up(max(1, _cdiv(N, 2)), sub)
        tile_rows = max(sub, min(budget_rows, pref))
    else:
        tile_rows = max(sub, _round_up(int(tile_rows), sub))
        tile_rows = min(tile_rows, budget_rows, _round_up(N, sub))
    grid_n = _cdiv(N, tile_rows)

    # --- inputs / specs (no padding of x: ragged last tile is masked in-kernel) ---
    labels2d = y.astype(jnp.int32).reshape(N, 1)
    inputs = [x, labels2d]
    in_specs = [
        pl.BlockSpec((tile_rows, C), lambda i: (i, 0)),    # logits row-tile
        pl.BlockSpec((tile_rows, 1), lambda i: (i, 0)),    # labels row-tile
    ]
    if has_weight:
        w = jnp.asarray(weight, dtype=jnp.float32)
        if fast_path:
            # Tiny XLA gather in the wrapper; kernel sees a (tile, 1) per-row factor.
            inputs.append(w[y.astype(jnp.int32)].reshape(N, 1))
            in_specs.append(pl.BlockSpec((tile_rows, 1), lambda i: (i, 0)))
        else:
            inputs.append(w.reshape(1, C))
            in_specs.append(pl.BlockSpec((1, C), lambda i: (0, 0)))   # resident

    kernel = functools.partial(
        _focal_loss_kernel,
        alpha=float(alpha), gamma=float(gamma),
        label_smooth=float(label_smooth), epsilon=float(epsilon),
        n_rows=N, tile_rows=tile_rows, has_weight=has_weight,
    )

    per_tile = pl.pallas_call(
        kernel,
        out_shape=jax.ShapeDtypeStruct((grid_n, 8, 128), jnp.float32),
        grid=(grid_n,),
        in_specs=in_specs,
        out_specs=pl.BlockSpec((1, 8, 128), lambda i: (i, 0, 0)),  # lane-dense partial sums
        compiler_params=pltpu.CompilerParams(
            dimension_semantics=("parallel",),        # split row-tiles across TCs (v7x)
            vmem_limit_bytes=32 * 1024 * 1024),
    )(*inputs)

    return jnp.sum(per_tile[:, 0, 0]) / jnp.float32(N)


def _reference_focal_loss(x, y, *, alpha=0.25, gamma=2.0, label_smooth=0.0,
                          weight=None, epsilon=1e-7):
    """Pure-JAX port of the PyTorch forward for verification."""
    N, C = x.shape
    one_hot = jax.nn.one_hot(y, C, dtype=jnp.float32)
    if label_smooth:
        one_hot = one_hot * (1.0 - label_smooth) + label_smooth / C
    sm = jax.nn.softmax(x.astype(jnp.float32), axis=1)
    sm = jnp.clip(sm, epsilon, 1.0 - epsilon)
    loss = -one_hot * jnp.log(sm)
    loss = loss * (alpha * jnp.abs(one_hot - sm) ** gamma)
    if weight is not None:
        loss = loss * jnp.asarray(weight, jnp.float32)
    return jnp.mean(jnp.sum(loss, axis=-1))


if __name__ == "__main__":
    key = jax.random.PRNGKey(0)
    kx1, ky1, kw, kx2, ky2, kx3, ky3, kx4, ky4 = jax.random.split(key, 9)

    C = 32
    wvec = jax.random.uniform(kw, (C,), dtype=jnp.float32) + 0.5

    # Case 1: fast path (label_smooth=0), no weight, 2 row-tiles.
    N1 = 16
    x1 = jax.random.normal(kx1, (N1, C), dtype=jnp.float32)
    y1 = jax.random.randint(ky1, (N1,), 0, C, dtype=jnp.int32)
    out1 = jax.block_until_ready(focal_loss_with_weight(x1, y1))
    ref1 = _reference_focal_loss(x1, y1)
    assert jnp.allclose(out1, ref1, rtol=1e-4, atol=1e-5), (out1, ref1)

    # Case 2: general path (label smoothing) + per-class weight + ragged last tile.
    N2 = 40
    x2 = jax.random.normal(kx2, (N2, C), dtype=jnp.float32)
    y2 = jax.random.randint(ky2, (N2,), 0, C, dtype=jnp.int32)
    out2 = jax.block_until_ready(
        focal_loss_with_weight(x2, y2, label_smooth=0.1, weight=wvec))
    ref2 = _reference_focal_loss(x2, y2, label_smooth=0.1, weight=wvec)
    assert jnp.allclose(out2, ref2, rtol=1e-4, atol=1e-5), (out2, ref2)

    # Case 3: fast path + gathered per-row weight + non-integer gamma + ragged tile.
    N3 = 20
    x3 = jax.random.normal(kx3, (N3, C), dtype=jnp.float32)
    y3 = jax.random.randint(ky3, (N3,), 0, C, dtype=jnp.int32)
    out3 = jax.block_until_ready(
        focal_loss_with_weight(x3, y3, weight=wvec, gamma=1.5))
    ref3 = _reference_focal_loss(x3, y3, weight=wvec, gamma=1.5)
    assert jnp.allclose(out3, ref3, rtol=1e-4, atol=1e-5), (out3, ref3)

    # Case 4: bf16 logits in native dtype (halves HBM traffic), 16-row sublane tiles.
    N4 = 24
    x4 = jax.random.normal(kx4, (N4, C), dtype=jnp.float32).astype(jnp.bfloat16)
    y4 = jax.random.randint(ky4, (N4,), 0, C, dtype=jnp.int32)
    out4 = jax.block_until_ready(focal_loss_with_weight(x4, y4))
    ref4 = _reference_focal_loss(x4.astype(jnp.float32), y4)
    assert jnp.allclose(out4, ref4, rtol=1e-4, atol=1e-5), (out4, ref4)

    print("KERNEL_OK")
</pallas_src>

<mosaic_0001>
module attributes {stable_mosaic.version = 11 : i64} {
  func.func @_focal_loss_kernel(%arg0: i32, %arg1: memref<8x32xf32, #tpu.memory_space<vmem>>, %arg2: memref<8x1xi32, #tpu.memory_space<vmem>>, %arg3: memref<1x8x128xf32, #tpu.memory_space<vmem>>) attributes {dimension_semantics = [#tpu.dimension_semantics<parallel>], iteration_bounds = array<i64: 2>, scalar_prefetch = 0 : i64, scratch_operands = 0 : i64, tpu.core_type = #tpu.core_type<tc>, window_params = [{transform_indices = @transform_0, window_bounds = array<i64: 8, 32>}, {transform_indices = @transform_1, window_bounds = array<i64: 8, 1>}, {transform_indices = @transform_2, window_bounds = array<i64: 1, 8, 128>}]} {
    %c0 = arith.constant 0 : index
    %c0_0 = arith.constant 0 : index
    %0 = vector.load %arg1[%c0, %c0_0] : memref<8x32xf32, #tpu.memory_space<vmem>>, vector<8x32xf32>
    %c0_1 = arith.constant 0 : index
    %c0_2 = arith.constant 0 : index
    %1 = vector.load %arg2[%c0_1, %c0_2] : memref<8x1xi32, #tpu.memory_space<vmem>>, vector<8x1xi32>
    %cst = arith.constant dense<0xFF800000> : vector<8xf32>
    %2 = vector.multi_reduction <maximumf>, %0, %cst [1] : vector<8x32xf32> to vector<8xf32>
    %3 = vector.shape_cast %2 : vector<8xf32> to vector<8x1xf32>
    %4 = vector.broadcast %3 : vector<8x1xf32> to vector<8x32xf32>
    %5 = arith.subf %0, %4 : vector<8x32xf32>
    %6 = math.exp %5 : vector<8x32xf32>
    %cst_3 = arith.constant dense<0.000000e+00> : vector<8xf32>
    %7 = vector.multi_reduction <add>, %6, %cst_3 [1] : vector<8x32xf32> to vector<8xf32>
    %8 = vector.shape_cast %7 : vector<8xf32> to vector<8x1xf32>
    %9 = math.log %8 : vector<8x1xf32>
    %10 = tpu.iota {dimensions = array<i32: 1>} : vector<8x32xi32>
    %11 = vector.broadcast %1 : vector<8x1xi32> to vector<8x32xi32>
    %12 = arith.cmpi eq, %10, %11 : vector<8x32xi32>
    %cst_4 = arith.constant 0.000000e+00 : f32
    %13 = vector.broadcast %cst_4 : f32 to vector<8x32xf32>
    %14 = arith.select %12, %5, %13 : vector<8x32xi1>, vector<8x32xf32>
    %cst_5 = arith.constant dense<0.000000e+00> : vector<8xf32>
    %15 = vector.multi_reduction <add>, %14, %cst_5 [1] : vector<8x32xf32> to vector<8xf32>
    %16 = vector.shape_cast %15 : vector<8xf32> to vector<8x1xf32>
    %17 = arith.subf %16, %9 : vector<8x1xf32>
    %cst_6 = arith.constant -16.1180954 : f32
    %cst_7 = arith.constant -1.00000008E-7 : f32
    %18 = vector.broadcast %cst_6 : f32 to vector<8x1xf32>
    %19 = arith.maximumf %18, %17 : vector<8x1xf32>
    %20 = vector.broadcast %cst_7 : f32 to vector<8x1xf32>
    %21 = arith.minimumf %20, %19 : vector<8x1xf32>
    %22 = math.exp %21 : vector<8x1xf32>
    %cst_8 = arith.constant 1.000000e+00 : f32
    %23 = vector.broadcast %cst_8 : f32 to vector<8x1xf32>
    %24 = arith.subf %23, %22 : vector<8x1xf32>
    %25 = arith.mulf %24, %24 : vector<8x1xf32>
    %cst_9 = arith.constant 0.000000e+00 : f32
    %26 = vector.broadcast %cst_9 : f32 to vector<8x1xf32>
    %27 = arith.subf %26, %21 : vector<8x1xf32>
    %28 = arith.mulf %27, %25 : vector<8x1xf32>
    %cst_10 = arith.constant 2.500000e-01 : f32
    %29 = vector.broadcast %cst_10 : f32 to vector<8x1xf32>
    %30 = arith.mulf %28, %29 : vector<8x1xf32>
    %c8_i32 = arith.constant 8 : i32
    %31 = arith.muli %arg0, %c8_i32 : i32
    %32 = tpu.iota {dimensions = array<i32: 0>} : vector<8x1xi32>
    %33 = vector.broadcast %31 : i32 to vector<8x1xi32>
    %34 = arith.addi %33, %32 : vector<8x1xi32>
    %c16_i32 = arith.constant 16 : i32
    %35 = vector.broadcast %c16_i32 : i32 to vector<8x1xi32>
    %36 = arith.cmpi slt, %34, %35 : vector<8x1xi32>
    %cst_11 = arith.constant 0.000000e+00 : f32
    %37 = vector.broadcast %cst_11 : f32 to vector<8x1xf32>
    %38 = arith.select %36, %30, %37 : vector<8x1xi1>, vector<8x1xf32>
    %cst_12 = arith.constant dense<0.000000e+00> : vector<1xf32>
    %39 = vector.multi_reduction <add>, %38, %cst_12 [0] : vector<8x1xf32> to vector<1xf32>
    %40 = vector.shape_cast %39 : vector<1xf32> to vector<1x1xf32>
    %41 = vector.shape_cast %40 : vector<1x1xf32> to vector<1x1x1xf32>
    %42 = vector.shape_cast %41 : vector<1x1x1xf32> to vector<1x1x1xf32>
    %43 = vector.broadcast %42 : vector<1x1x1xf32> to vector<1x8x128xf32>
    %c0_13 = arith.constant 0 : index
    %c0_14 = arith.constant 0 : index
    %c0_15 = arith.constant 0 : index
    %44 = vector.load %arg3[%c0_13, %c0_14, %c0_15] : memref<1x8x128xf32, #tpu.memory_space<vmem>>, vector<1x8x128xf32>
    tpu.vector_store %arg3[%c0_13, %c0_14, %c0_15], %43 {strides = array<i32>} : memref<1x8x128xf32, #tpu.memory_space<vmem>>, vector<1x8x128xf32>,
    return
  }
  func.func @transform_0(%arg0: i32) -> (i32, i32) {
    %c0_i32 = arith.constant 0 : i32
    %c0_i32_0 = arith.constant 0 : i32
    return %arg0, %c0_i32 : i32, i32
  }
  func.func @transform_1(%arg0: i32) -> (i32, i32) {
    %c0_i32 = arith.constant 0 : i32
    %c0_i32_0 = arith.constant 0 : i32
    return %arg0, %c0_i32 : i32, i32
  }
  func.func @transform_2(%arg0: i32) -> (i32, i32, i32) {
    %c0_i32 = arith.constant 0 : i32
    %c0_i32_0 = arith.constant 0 : i32
    %c0_i32_1 = arith.constant 0 : i32
    return %arg0, %c0_i32, %c0_i32_0 : i32, i32, i32
  }
}

</mosaic_0001>

<llo_original>
// kernel: tpu_custom_call.1
$region0: #{tpu_custom_call.1}
  #allocation0 [shape = 'u32[]', space=smem, size = 0x4, offset = 0x4, fixed_abs, tag = 'smem constant byte address 0x4 - core index']
  #allocation1 [shape = 'u32[144,128]{1,0:T(1,128)}', space=vmem, size = 0x12000, scoped, tag = 'internal scratch']
  %s0 = inlined_call_operand.vmem [shape: f32[16,32], index: 0, kind: input, shape index: {}]
  %s1 = inlined_call_operand.vmem [shape: s32[16,1], index: 1, kind: input, shape index: {}]
  %s2 = inlined_call_operand.hbm [shape: f32[2,8,128], index: 2, kind: output, shape index: {}]
  %s3 = sld [smem:[#allocation0]]
  $region41: #{tpu_custom_call.1} parent=0
    _
  %s5 = ssub.s32 1, %s3
  %s6 = scalar_select 0, %s5, %s3
  $region1: #{tpu_custom_call.1} parent=0
    #allocation2 [shape = 'u8[8192]{0}', space=vmem, size = 0x2000, scoped, tag = 'output window, operand 0']
    #allocation3 [shape = 's32[2]{0}', space=sflag, size = 0x8, scoped, tag = 'scoped memory for tpu_custom_call.1']
    %7 = vsyncpa [#allocation3], 0
    %s8 = scalar_lea.sflag [#allocation3], 1
    %9 = vsyncpa %s8, 0
    loop: start=0, step=1, limit=4
    $region2: #{tpu_custom_call.1} parent=1 // loop_pre_header
      _
    $region3: #{tpu_custom_call.1} parent=1 // loop_header
      %s11 = sphi 0, %s15
      %p12 = scmp.ge.s32.totalorder %s11, 4
      %s21 = sphi 0, %s23
      %s24 = sphi 0, %s21
      %s25 = sphi 0, %s24
      %s41 = sphi 0, %s25
      %s47 = sphi 0, %s49
      %s50 = sphi 0, %s47
      %s51 = sphi 0, %s50
      %s67 = sphi 0, %s51
      %s73 = sphi 0, %s75
      %s76 = sphi 0, %s73
      %s77 = sphi 0, %s76
      %s93 = sphi 0, %s77
    $region4: #{tpu_custom_call.1} parent=1 // loop_header_branch
      %14 = sbr.rel (%p12) target = $region8
    $region5: #{tpu_custom_call.1} parent=1 // loop_body
      %s16 = ssub.s32 %s11, 1
      %s17 = ssub.s32 %s11, 2
      %s18 = sadd.s32 %s11, 1
      %s19 = ssub.s32 %s11, %s18
      %p20 = scmp.eq.s32.totalorder %s19, 0
      %s22 = sadd.s32 %s21, 1
      %s23 = scalar_select %p20, %s21, %s22
      %p26 = pneg %p20
      %p27 = scmp.eq.s32.totalorder %s11, 1
      %p28 = por %p26, %p27
      %p29 = scmp.ne.s32.totalorder %s21, %s24
      %p30 = scmp.eq.s32.totalorder %s11, 0
      %p31 = por %p29, %p30
      %p32 = scmp.ne.s32.totalorder %s21, %s24
      %p33 = scmp.eq.s32.totalorder %s16, 1
      %p34 = por %p32, %p33
      %p35 = scmp.ne.s32.totalorder %s24, %s25
      %p36 = scmp.eq.s32.totalorder %s16, 0
      %p37 = por %p35, %p36
      %p38 = scmp.ne.s32.totalorder %s24, %s25
      %p39 = scmp.eq.s32.totalorder %s17, 1
      %p40 = por %p38, %p39
      %p42 = scmp.ne.s32.totalorder %s25, %s41
      %p43 = scmp.eq.s32.totalorder %s17, 0
      %p44 = por %p42, %p43
      %s45 = ssub.s32 %s11, %s18
      %p46 = scmp.eq.s32.totalorder %s45, 0
      %s48 = sadd.s32 %s47, 1
      %s49 = scalar_select %p46, %s47, %s48
      %p52 = pneg %p46
      %p53 = scmp.eq.s32.totalorder %s11, 1
      %p54 = por %p52, %p53
      %p55 = scmp.ne.s32.totalorder %s47, %s50
      %p56 = scmp.eq.s32.totalorder %s11, 0
      %p57 = por %p55, %p56
      %p58 = scmp.ne.s32.totalorder %s47, %s50
      %p59 = scmp.eq.s32.totalorder %s16, 1
      %p60 = por %p58, %p59
      %p61 = scmp.ne.s32.totalorder %s50, %s51
      %p62 = scmp.eq.s32.totalorder %s16, 0
      %p63 = por %p61, %p62
      %p64 = scmp.ne.s32.totalorder %s50, %s51
      %p65 = scmp.eq.s32.totalorder %s17, 1
      %p66 = por %p64, %p65
      %p68 = scmp.ne.s32.totalorder %s51, %s67
      %p69 = scmp.eq.s32.totalorder %s17, 0
      %p70 = por %p68, %p69
      %s71 = ssub.s32 %s11, %s18
      %p72 = scmp.eq.s32.totalorder %s71, 0
      %s74 = sadd.s32 %s73, 1
      %s75 = scalar_select %p72, %s73, %s74
      %p78 = pneg %p72
      %p79 = scmp.eq.s32.totalorder %s11, 1
      %p80 = por %p78, %p79
      %p81 = scmp.ne.s32.totalorder %s73, %s76
      %p82 = scmp.eq.s32.totalorder %s11, 0
      %p83 = por %p81, %p82
      %p84 = scmp.ne.s32.totalorder %s73, %s76
      %p85 = scmp.eq.s32.totalorder %s16, 1
      %p86 = por %p84, %p85
      %p87 = scmp.ne.s32.totalorder %s76, %s77
      %p88 = scmp.eq.s32.totalorder %s16, 0
      %p89 = por %p87, %p88
      %p90 = scmp.ne.s32.totalorder %s76, %s77
      %p91 = scmp.eq.s32.totalorder %s17, 1
      %p92 = por %p90, %p91
      %p94 = scmp.ne.s32.totalorder %s77, %s93
      %p95 = scmp.eq.s32.totalorder %s17, 0
      %p96 = por %p94, %p95
      %p97 = scmp.le.s32.totalorder 1, %s11
      %p98 = scmp.lt.s32.totalorder %s11, 3
      %p99 = pnand %p97, %p98
      %p100 = pneg %p99
      // Predicated region
      $region9: #{tpu_custom_call.1} parent=5 // pred_check
        _
      $region10: #{tpu_custom_call.1} parent=5 // pred_check_branch
        %102 = sbr.rel (%p99) target = $region12
      $region11: #{tpu_custom_call.1} parent=5 // pred_region
        %s103 = ssub.s32 %s11, 1
      $region12: #{tpu_custom_call.1} parent=5 // pred_fallthru
        _
      %p104 = scmp.lt.s32.totalorder %s11, 2
      // Predicated region
      $region13: #{tpu_custom_call.1} parent=5 // pred_check
        %p105 = pneg %p104
      $region14: #{tpu_custom_call.1} parent=5 // pred_check_branch
        %107 = sbr.rel (%p105) target = $region16
      $region15: #{tpu_custom_call.1} parent=5 // pred_region
        // Predicated region
        $region17: #{tpu_custom_call.1} parent=15 // pred_check
          %p108 = pneg %p31
        $region18: #{tpu_custom_call.1} parent=15 // pred_check_branch
          %110 = sbr.rel (%p108) target = $region20
        $region19: #{tpu_custom_call.1} parent=15 // pred_region
          %p111 = scmp.lt.s32.totalorder %s11, 1
          %s112 = scalar_select %p111, %s11, 1
          %s113 = smul.addr %s112, 8
          %s114 = scalar_lea.vmem %s0, %s113
        $region20: #{tpu_custom_call.1} parent=15 // pred_fallthru
          _
        // Predicated region
        $region21: #{tpu_custom_call.1} parent=15 // pred_check
          %p115 = pneg %p57
        $region22: #{tpu_custom_call.1} parent=15 // pred_check_branch
          %117 = sbr.rel (%p115) target = $region24
        $region23: #{tpu_custom_call.1} parent=15 // pred_region
          %p118 = scmp.lt.s32.totalorder %s11, 1
          %s119 = scalar_select %p118, %s11, 1
          %s120 = smul.addr %s119, 8
          %s121 = scalar_lea.vmem %s1, %s120
        $region24: #{tpu_custom_call.1} parent=15 // pred_fallthru
          _
      $region16: #{tpu_custom_call.1} parent=5 // pred_fallthru
        _
      %p122 = scmp.le.s32.totalorder 1, %s11
      %p123 = scmp.lt.s32.totalorder %s11, 3
      %p124 = pnand %p122, %p123
      %p125 = pneg %p124
      // Predicated region
      $region25: #{tpu_custom_call.1} parent=5 // pred_check
        _
      $region26: #{tpu_custom_call.1} parent=5 // pred_check_branch
        %127 = sbr.rel (%p124) target = $region28
      $region27: #{tpu_custom_call.1} parent=5 // pred_region
        %s128 = ssub.s32 %s11, 1
        %p129 = scmp.lt.s32.totalorder %s16, 1
        %s130 = scalar_select %p129, %s16, 1
        %s131 = smul.addr %s130, 8
        %s132 = scalar_lea.vmem %s0, %s131
        %p133 = pneg %p37
        %p134 = pneg %p34
        %p135 = scmp.lt.s32.totalorder %s16, 1
        %s136 = scalar_select %p135, %s16, 1
        %s137 = smul.addr %s136, 8
        %s138 = scalar_lea.vmem %s1, %s137
        %p139 = pneg %p63
        %p140 = pneg %p60
        %p141 = pneg %p89
        %p142 = pneg %p86
        %s143 = sand.u32 %s76, 1
        %s144 = scalar_lea.sflag [#allocation3], %s143
        %s145 = sand.u32 %s76, 1
        %s146 = smul.addr %s145, 8
        %s147 = scalar_lea.vmem [#allocation2], %s146
        %p148 = scmp.lt.s32.totalorder %s16, 1
        %s149 = scalar_select %p148, %s16, 1
        %s150 = smul.addr %s149, 8
        %s151 = scalar_lea.vmem %s0, %s150
        %p152 = scmp.lt.s32.totalorder %s16, 1
        %s153 = scalar_select %p152, %s16, 1
        %s154 = smul.addr %s153, 8
        %s155 = scalar_lea.vmem %s1, %s154
        %v156 = vld [vmem:[%s151] sm:$0xff]
        %v157 = vld [vmem:[%s155] sm:$0xff]
        %vm158 = vcmask 261120
        %v159 = vsel %vm158, %v156, -inf
        %160 = vmax.xlane.f32.xlu0 %v159
        %v161 = vpop.xlane.xlu0 %160
        %v162 = vsub.f32 %v156, %v161
        %v163 = vmul.f32 %v162, 1.442695
        %v164 = vpow.pop %v163
        %v165 = vsel %vm158, %v164, 0.0
        %166 = vadd.xlane.f32.xlu0 %v165
        %v167 = vpop.xlane.xlu0 %166
        %v168 = vlog2.pop %v167
        %v169 = vmul.f32 %v168, 0.6931472
        %v170 = vlaneseq
        %v171 = vand.u32 %v170, 127
        %172 = vset.pattern.permute.xlu0 0
        %173 = vperm.xlu0 %172, %v157
        %v174 = vpop.permute.xlu0 %173
        %vm175 = vcmp.eq.s32.totalorder %v171, %v174
        %v176 = vsel %vm175, %v162, 0.0
        %v177 = vsel %vm158, %v176, 0.0
        %178 = vadd.xlane.f32.xlu0 %v177
        %v179 = vpop.xlane.xlu0 %178
        %v180 = vsub.f32 %v179, %v169
        %v181 = vmax.f32 %v180, -16.118095
        %v182 = vmin.f32 %v181, -1.0000001e-07
        %v183 = vmul.f32 %v182, 1.442695
        %v184 = vpow.pop %v183
        %v185 = vsub.f32 1.0, %v184
        %v186 = vmul.f32 %v185, %v185
        %v187 = vsub.f32 0.0, %v182
        %v188 = vmul.f32 %v187, %v186
        %v189 = vmul.f32 %v188, 0.25
        %s190 = smul.u32 %s16, 8
        %v191 = vlaneseq
        %v192 = vshrl.u32 %v191, 7
        %v193 = vstv %s190
        %v194 = vadd.s32 %v193, %v192
        %vm195 = vcmp.lt.s32.totalorder %v194, 16
        %v196 = vsel %vm195, %v189, 0.0
        %v197 = vrot.slane %v196, 4
        %v198 = vadd.f32 %v196, %v197
        %v199 = vrot.slane %v198, 2
        %v200 = vadd.f32 %v198, %v199
        %v201 = vrot.slane %v200, 1
        %v202 = vadd.f32 %v200, %v201
        %203 = vst [vmem:[%s147] sm:$0xff] %v202
        %s204 = sand.u32 %s76, 1
        %s205 = scalar_lea.sflag [#allocation3], %s204
        %s206 = sand.u32 %s76, 1
        %s207 = smul.addr %s206, 8
        %s208 = scalar_lea.vmem [#allocation2], %s207
        // Predicated region
        $region29: #{tpu_custom_call.1} parent=27 // pred_check
          %p209 = pneg %p86
        $region30: #{tpu_custom_call.1} parent=27 // pred_check_branch
          %211 = sbr.rel (%p209) target = $region32
        $region31: #{tpu_custom_call.1} parent=27 // pred_region
          %s213 = ssub.s32 128, 128
          %214 = vsyncadd %s205, %s213
          %s215 = smul.addr %s16, 128
          %s216 = scalar_lea.hbm %s2, %s215
          %s218 = sshll.u32 %s208, 4
          %s219 = int_to_ptr.vmem [resolvable:$true] %s218
          %221 = dma.vmem_to_hbm [thread:$0]  %s219, 128, %s216, %s205
        $region32: #{tpu_custom_call.1} parent=27 // pred_fallthru
          _
      $region28: #{tpu_custom_call.1} parent=5 // pred_fallthru
        _
      %p222 = scmp.le.s32.totalorder 2, %s11
      // Predicated region
      $region33: #{tpu_custom_call.1} parent=5 // pred_check
        %p223 = pneg %p222
      $region34: #{tpu_custom_call.1} parent=5 // pred_check_branch
        %225 = sbr.rel (%p223) target = $region36
      $region35: #{tpu_custom_call.1} parent=5 // pred_region
        %s226 = ssub.s32 %s11, 2
        // Predicated region
        $region37: #{tpu_custom_call.1} parent=35 // pred_check
          %p227 = pneg %p92
        $region38: #{tpu_custom_call.1} parent=35 // pred_check_branch
          %229 = sbr.rel (%p227) target = $region40
        $region39: #{tpu_custom_call.1} parent=35 // pred_region
          %s230 = sand.u32 %s77, 1
          %s231 = scalar_lea.sflag [#allocation3], %s230
          %s232 = sand.u32 %s77, 1
          %s233 = smul.addr %s232, 8
          %s234 = scalar_lea.vmem [#allocation2], %s233
          %235 = dma.done %s231, 128
        $region40: #{tpu_custom_call.1} parent=35 // pred_fallthru
          _
      $region36: #{tpu_custom_call.1} parent=5 // pred_fallthru
        _
    $region6: #{tpu_custom_call.1} parent=1 // loop_footer
      %s15 = sadd.s32 1, %s11
    $region7: #{tpu_custom_call.1} parent=1 // loop_footer_branch
      %10 = sbr.rel target = $region3
    $region8: #{tpu_custom_call.1} parent=1 // loop_exit
      _
    %236 = vsyncpa [#allocation3], 1
    %s237 = scalar_lea.sflag [#allocation3], 1
    %238 = vsyncpa %s237, 1

</llo_original>
